<compile_context>
chip_gen: v7x
topology: tpu7x:2x2x1
jax: 0.10.0
libtpu: 0.0.40
codegen_flags: <defaults>
</compile_context>

<pallas_src>
import numpy as np
import jax
import jax.numpy as jnp
from jax.experimental import pallas as pl
from jax.experimental.pallas import tpu as pltpu  # noqa: F401  (kept for TPU backend symmetry)


def _identity_kernel(x_ref, o_ref):
    # Full-array VMEM tile copy (aliased with the input buffer).
    o_ref[...] = x_ref[...]


def meta_forward(x):
    """Meta.forward(x): identity, expressed as a minimal aliased Pallas copy."""
    ndim = x.ndim
    return pl.pallas_call(
        _identity_kernel,
        out_shape=jax.ShapeDtypeStruct(x.shape, x.dtype),
        in_specs=[pl.BlockSpec(x.shape, lambda: (0,) * ndim)],
        out_specs=pl.BlockSpec(x.shape, lambda: (0,) * ndim),
        input_output_aliases={0: 0},
    )(x)


if __name__ == "__main__":
    key = jax.random.PRNGKey(0)
    key, kx = jax.random.split(key)

    # Input consistent with the config's first conv2d (3 input channels), NCHW.
    x = jax.random.normal(kx, (2, 3, 16, 16), jnp.float32)

    # Host copy of the reference values (input buffer is donated via aliasing).
    x_host = np.asarray(x)

    y = meta_forward(x)
    y = jax.block_until_ready(y)

    assert y.shape == x_host.shape and y.dtype == x_host.dtype
    assert np.array_equal(np.asarray(y), x_host)
    print("KERNEL_OK")
</pallas_src>

<mosaic_0001>
module attributes {stable_mosaic.version = 11 : i64} {
  func.func @_identity_kernel(%arg0: memref<2x3x16x16xf32, #tpu.memory_space<vmem>>, %arg1: memref<2x3x16x16xf32, #tpu.memory_space<vmem>>) attributes {dimension_semantics = [], scalar_prefetch = 0 : i64, scratch_operands = 0 : i64, tpu.core_type = #tpu.core_type<tc>} {
    %c0 = arith.constant 0 : index
    %c0_0 = arith.constant 0 : index
    %c0_1 = arith.constant 0 : index
    %c0_2 = arith.constant 0 : index
    %0 = vector.load %arg0[%c0, %c0_0, %c0_1, %c0_2] : memref<2x3x16x16xf32, #tpu.memory_space<vmem>>, vector<2x3x16x16xf32>
    %c0_3 = arith.constant 0 : index
    %c0_4 = arith.constant 0 : index
    %c0_5 = arith.constant 0 : index
    %c0_6 = arith.constant 0 : index
    %1 = vector.load %arg1[%c0_3, %c0_4, %c0_5, %c0_6] : memref<2x3x16x16xf32, #tpu.memory_space<vmem>>, vector<2x3x16x16xf32>
    tpu.vector_store %arg1[%c0_3, %c0_4, %c0_5, %c0_6], %0 {strides = array<i32>} : memref<2x3x16x16xf32, #tpu.memory_space<vmem>>, vector<2x3x16x16xf32>,
    return
  }
}

</mosaic_0001>

<llo_original>
// kernel: tpu_custom_call.1
$region0: #{tpu_custom_call.1}
  #allocation0 [shape = 'u32[]', space=smem, size = 0x4, offset = 0x4, fixed_abs, tag = 'smem constant byte address 0x4 - core index']
  #allocation1 [shape = 'u32[144,128]{1,0:T(1,128)}', space=vmem, size = 0x12000, scoped, tag = 'internal scratch']
  %s0 = inlined_call_operand.hbm [shape: f32[2,3,16,16], index: 0, kind: input, shape index: {}, may-alias: {0,1}]
  %s1 = inlined_call_operand.hbm [shape: f32[2,3,16,16], index: 1, kind: output, shape index: {}, may-alias: {0,1}]
  %s2 = sld [smem:[#allocation0]]
  $region18: #{tpu_custom_call.1} parent=0
    _
  %s4 = ssub.s32 1, %s2
  %s5 = scalar_select 0, %s4, %s2
  $region1: #{tpu_custom_call.1} parent=0
    #allocation2 [shape = 'u8[49152]{0}', space=vmem, size = 0xc000, scoped, tag = 'input window, operand 0, single buffered']
    #allocation3 [shape = 's32[1]{0}', space=sflag, size = 0x4, scoped, tag = 'scoped memory for tpu_custom_call.1']
    #allocation4 [shape = 's32[1]{0}', space=sflag, size = 0x4, scoped, tag = 'scoped memory for tpu_custom_call.1']
    #allocation5 [shape = 'u8[49152]{0}', space=vmem, size = 0xc000, scoped, tag = 'output window, operand 0, single buffered']
    %6 = vsyncpa [#allocation3], 0
    %7 = vsyncpa [#allocation4], 0
    // Predicated region
    $region2: #{tpu_custom_call.1} parent=1 // pred_check
      _
    $region3: #{tpu_custom_call.1} parent=1 // pred_check_branch
      %9 = sbr.rel (0) target = $region5
    $region4: #{tpu_custom_call.1} parent=1 // pred_region
      %s11 = ssub.s32 1536, 1536
      %12 = vsyncadd [#allocation3], %s11
      %s13 = sshll.u32 [#allocation2], 4
      %s14 = int_to_ptr.vmem [resolvable:$true] %s13
      %19 = dma.hbm_to_vmem [thread:$0]  %s0, 1536, %s14, [#allocation3], 128, 128, 8
    $region5: #{tpu_custom_call.1} parent=1 // pred_fallthru
      _
    // Predicated region
    $region6: #{tpu_custom_call.1} parent=1 // pred_check
      _
    $region7: #{tpu_custom_call.1} parent=1 // pred_check_branch
      %21 = sbr.rel (0) target = $region9
    $region8: #{tpu_custom_call.1} parent=1 // pred_region
      %22 = dma.done [#allocation3], 1536
    $region9: #{tpu_custom_call.1} parent=1 // pred_fallthru
      _
    %v23 = vld [vmem:[#allocation2] sm:$0xff]
    %v24 = vld [vmem:[#allocation2 + $0x8] sm:$0xff]
    %v25 = vld [vmem:[#allocation2 + $0x10] sm:$0xff]
    %v26 = vld [vmem:[#allocation2 + $0x18] sm:$0xff]
    %v27 = vld [vmem:[#allocation2 + $0x20] sm:$0xff]
    %v28 = vld [vmem:[#allocation2 + $0x28] sm:$0xff]
    %v29 = vld [vmem:[#allocation2 + $0x30] sm:$0xff]
    %v30 = vld [vmem:[#allocation2 + $0x38] sm:$0xff]
    %v31 = vld [vmem:[#allocation2 + $0x40] sm:$0xff]
    %v32 = vld [vmem:[#allocation2 + $0x48] sm:$0xff]
    %v33 = vld [vmem:[#allocation2 + $0x50] sm:$0xff]
    %v34 = vld [vmem:[#allocation2 + $0x58] sm:$0xff]
    %vm35 = vcmask 130048
    %36 = vst.msk [vmem:[#allocation5] sm:$0xff] %vm35, %v23
    %37 = vst.msk [vmem:[#allocation5 + $0x8] sm:$0xff] %vm35, %v24
    %38 = vst.msk [vmem:[#allocation5 + $0x10] sm:$0xff] %vm35, %v25
    %39 = vst.msk [vmem:[#allocation5 + $0x18] sm:$0xff] %vm35, %v26
    %40 = vst.msk [vmem:[#allocation5 + $0x20] sm:$0xff] %vm35, %v27
    %41 = vst.msk [vmem:[#allocation5 + $0x28] sm:$0xff] %vm35, %v28
    %42 = vst.msk [vmem:[#allocation5 + $0x30] sm:$0xff] %vm35, %v29
    %43 = vst.msk [vmem:[#allocation5 + $0x38] sm:$0xff] %vm35, %v30
    %44 = vst.msk [vmem:[#allocation5 + $0x40] sm:$0xff] %vm35, %v31
    %45 = vst.msk [vmem:[#allocation5 + $0x48] sm:$0xff] %vm35, %v32
    %46 = vst.msk [vmem:[#allocation5 + $0x50] sm:$0xff] %vm35, %v33
    %47 = vst.msk [vmem:[#allocation5 + $0x58] sm:$0xff] %vm35, %v34
    // Predicated region
    $region10: #{tpu_custom_call.1} parent=1 // pred_check
      _
    $region11: #{tpu_custom_call.1} parent=1 // pred_check_branch
      %49 = sbr.rel (0) target = $region13
    $region12: #{tpu_custom_call.1} parent=1 // pred_region
      %s51 = ssub.s32 1536, 1536
      %52 = vsyncadd [#allocation4], %s51
      %s53 = sshll.u32 [#allocation5], 4
      %s54 = int_to_ptr.vmem [resolvable:$true] %s53
      %59 = dma.vmem_to_hbm [thread:$0]  %s54, 1536, %s1, [#allocation4], 128, 128, 8
    $region13: #{tpu_custom_call.1} parent=1 // pred_fallthru
      _
    // Predicated region
    $region14: #{tpu_custom_call.1} parent=1 // pred_check
      _
    $region15: #{tpu_custom_call.1} parent=1 // pred_check_branch
      %61 = sbr.rel (0) target = $region17
    $region16: #{tpu_custom_call.1} parent=1 // pred_region
      %62 = dma.done [#allocation4], 1536
    $region17: #{tpu_custom_call.1} parent=1 // pred_fallthru
      _
    %63 = vsyncpa [#allocation3], 1
    %64 = vsyncpa [#allocation4], 1

</llo_original>
